<compile_context>
chip_gen: v6e
topology: v6e:2x2x1
jax: 0.10.0
libtpu: 0.0.40
codegen_flags: <defaults>
</compile_context>

<pallas_src>
import functools

import jax
import jax.numpy as jnp
from jax.experimental import pallas as pl
from jax.experimental.pallas import tpu as pltpu


def _conv_relu_kernel(x_ref, w_ref, b_ref, o_ref, *, TH, W, Cin, Cout_pad):
    # x_ref: (1, H+2, W+2, Cin)   whole spatially-padded image (compute dtype)
    # w_ref: (9*Cin, Cout_pad)    fused conv weights, K ordered (kw, kh, cin)
    # b_ref: (1, Cout_pad)        f32 bias (zero in the padded lanes)
    # o_ref: (1, TH, W, Cout_pad) lane-dense output tile
    h = pl.program_id(1)
    r0 = h * TH  # first padded input row needed for this output-row tile

    # 3 contiguous kh row-slabs; slicing the untiled H axis is cheap.
    rows = [x_ref[0, pl.ds(r0 + kh, TH), :, :] for kh in range(3)]  # (TH, W+2, Cin)
    row_cat = jnp.concatenate(rows, axis=-1)                        # (TH, W+2, 3*Cin)

    # kw shifts: 3 slices of the combined slab (instead of 9 per-tap copies).
    cols = [row_cat[:, kw:kw + W, :] for kw in range(3)]            # (TH, W, 3*Cin)
    patch = jnp.concatenate(cols, axis=-1).reshape(TH * W, 9 * Cin)

    # One fused MXU matmul: bf16 operands, f32 accumulation.
    acc = jnp.dot(patch, w_ref[...], preferred_element_type=jnp.float32)
    acc = jnp.maximum(acc + b_ref[...], 0.0)                        # bias + ReLU in f32
    o_ref[...] = acc.reshape(1, TH, W, Cout_pad).astype(o_ref.dtype)


def conv_relu_pallas(x_nchw, weight, bias, *, compute_dtype=jnp.bfloat16):
    """x_nchw: (N, Cin, H, W); weight: (Cout, Cin, 3, 3); bias: (Cout,)."""
    N, Cin, H, W = x_nchw.shape
    Cout = weight.shape[0]

    LANES = 128
    Cout_pad = ((Cout + LANES - 1) // LANES) * LANES   # lane-dense output stores
    TH = 8 if H % 8 == 0 else H                        # output rows per grid step
    n_h = H // TH

    # NCHW -> NHWC (PyTorch interface), cast to compute dtype, zero-pad the
    # 1-pixel halo; XLA fuses these into a single layout pass.
    x_prep = jnp.pad(
        jnp.transpose(x_nchw, (0, 2, 3, 1)).astype(compute_dtype),
        ((0, 0), (1, 1), (1, 1), (0, 0)))

    # (Cout, Cin, 3, 3) -> (kw, kh, Cin, Cout) -> (9*Cin, Cout_pad); this K
    # ordering matches the in-kernel im2col channel order. Padded lanes are 0.
    w_slab = jnp.transpose(weight, (3, 2, 1, 0)).reshape(9 * Cin, Cout)
    w_slab = jnp.pad(w_slab, ((0, 0), (0, Cout_pad - Cout))).astype(compute_dtype)
    b_pad = jnp.pad(bias, (0, Cout_pad - Cout)).reshape(1, Cout_pad).astype(jnp.float32)

    kernel = functools.partial(
        _conv_relu_kernel, TH=TH, W=W, Cin=Cin, Cout_pad=Cout_pad)

    out_nhwc = pl.pallas_call(
        kernel,
        out_shape=jax.ShapeDtypeStruct((N, H, W, Cout_pad), x_nchw.dtype),
        grid_spec=pltpu.PrefetchScalarGridSpec(
            num_scalar_prefetch=0,
            grid=(N, n_h),
            in_specs=[
                # Whole padded image; index_map ignores h, so the block is only
                # re-fetched when the batch index changes.
                pl.BlockSpec((1, H + 2, W + 2, Cin), lambda n, h: (n, 0, 0, 0)),
                # Constant weight / bias blocks (index never changes -> no re-DMA).
                pl.BlockSpec((9 * Cin, Cout_pad), lambda n, h: (0, 0)),
                pl.BlockSpec((1, Cout_pad), lambda n, h: (0, 0)),
            ],
            out_specs=pl.BlockSpec((1, TH, W, Cout_pad), lambda n, h: (n, h, 0, 0)),
        ),
        compiler_params=pltpu.CompilerParams(
            dimension_semantics=("parallel", "parallel"),
            vmem_limit_bytes=32 * 1024 * 1024),
    )(x_prep, w_slab, b_pad)

    # Drop lane padding, NHWC -> NCHW to match torch.nn.Conv2d output layout.
    return jnp.transpose(out_nhwc[..., :Cout], (0, 3, 1, 2))


def conv_relu_reference(x_nchw, weight, bias, compute_dtype=jnp.float32):
    """Pure-JAX reference (torch.nn.Conv2d NCHW, padding=1, + ReLU)."""
    out = jax.lax.conv_general_dilated(
        x_nchw.astype(compute_dtype), weight.astype(compute_dtype),
        window_strides=(1, 1), padding=((1, 1), (1, 1)),
        dimension_numbers=("NCHW", "OIHW", "NCHW"),
        preferred_element_type=jnp.float32)
    out = out + bias.reshape(1, -1, 1, 1)
    return jnp.maximum(out, 0.0).astype(x_nchw.dtype)


if __name__ == "__main__":
    key = jax.random.PRNGKey(0)
    kx, kw, kb = jax.random.split(key, 3)

    N, Cin, Cout, H, W = 2, 4, 8, 16, 16

    x = jax.random.normal(kx, (N, Cin, H, W), dtype=jnp.float32)
    fan_in = Cin * 3 * 3
    bound = 1.0 / (fan_in ** 0.5)
    weight = jax.random.uniform(kw, (Cout, Cin, 3, 3), jnp.float32, -bound, bound)
    bias = jax.random.uniform(kb, (Cout,), jnp.float32, -bound, bound)

    out = jax.block_until_ready(conv_relu_pallas(x, weight, bias))
    assert out.shape == (N, Cout, H, W)

    # Compare against a reference using the same operand precision
    # (bf16 operands, f32 accumulation), which matches the kernel's math.
    ref = conv_relu_reference(x, weight, bias, compute_dtype=jnp.bfloat16)
    assert jnp.allclose(out, ref, atol=1e-3, rtol=1e-3), "mismatch vs reference"

    print("KERNEL_OK")
</pallas_src>

<mosaic_0001>
module attributes {stable_mosaic.version = 11 : i64} {
  func.func @_conv_relu_kernel(%arg0: i32, %arg1: i32, %arg2: memref<1x18x18x4xbf16, #tpu.memory_space<vmem>>, %arg3: memref<36x128xbf16, #tpu.memory_space<vmem>>, %arg4: memref<1x128xf32, #tpu.memory_space<vmem>>, %arg5: memref<1x8x16x128xf32, #tpu.memory_space<vmem>>) attributes {dimension_semantics = [#tpu.dimension_semantics<parallel>, #tpu.dimension_semantics<parallel>], iteration_bounds = array<i64: 2, 2>, scalar_prefetch = 0 : i64, scratch_operands = 0 : i64, tpu.core_type = #tpu.core_type<tc>, window_params = [{transform_indices = @transform_0, window_bounds = array<i64: 1, 18, 18, 4>}, {pipeline_mode = #tpu.pipeline_mode<synchronous>, transform_indices = @transform_1, window_bounds = array<i64: 36, 128>}, {pipeline_mode = #tpu.pipeline_mode<synchronous>, transform_indices = @transform_2, window_bounds = array<i64: 1, 128>}, {transform_indices = @transform_3, window_bounds = array<i64: 1, 8, 16, 128>}]} {
    %c8_i32 = arith.constant 8 : i32
    %0 = arith.muli %arg1, %c8_i32 : i32
    %c0_i32 = arith.constant 0 : i32
    %1 = arith.addi %0, %c0_i32 : i32
    %c0 = arith.constant 0 : index
    %2 = arith.index_cast %1 : i32 to index
    %c0_0 = arith.constant 0 : index
    %c0_1 = arith.constant 0 : index
    %3 = vector.load %arg2[%c0, %2, %c0_0, %c0_1] : memref<1x18x18x4xbf16, #tpu.memory_space<vmem>>, vector<1x8x18x4xbf16>
    %4 = vector.shape_cast %3 : vector<1x8x18x4xbf16> to vector<8x18x4xbf16>
    %c1_i32 = arith.constant 1 : i32
    %5 = arith.addi %0, %c1_i32 : i32
    %c0_2 = arith.constant 0 : index
    %6 = arith.index_cast %5 : i32 to index
    %c0_3 = arith.constant 0 : index
    %c0_4 = arith.constant 0 : index
    %7 = vector.load %arg2[%c0_2, %6, %c0_3, %c0_4] : memref<1x18x18x4xbf16, #tpu.memory_space<vmem>>, vector<1x8x18x4xbf16>
    %8 = vector.shape_cast %7 : vector<1x8x18x4xbf16> to vector<8x18x4xbf16>
    %c2_i32 = arith.constant 2 : i32
    %9 = arith.addi %0, %c2_i32 : i32
    %c0_5 = arith.constant 0 : index
    %10 = arith.index_cast %9 : i32 to index
    %c0_6 = arith.constant 0 : index
    %c0_7 = arith.constant 0 : index
    %11 = vector.load %arg2[%c0_5, %10, %c0_6, %c0_7] : memref<1x18x18x4xbf16, #tpu.memory_space<vmem>>, vector<1x8x18x4xbf16>
    %12 = vector.shape_cast %11 : vector<1x8x18x4xbf16> to vector<8x18x4xbf16>
    %13 = tpu.concatenate %4, %8, %12 in 2 : vector<8x18x4xbf16>, vector<8x18x4xbf16>, vector<8x18x4xbf16> -> vector<8x18x12xbf16>
    %14 = vector.extract_strided_slice %13 {offsets = [0, 0, 0], sizes = [8, 16, 12], strides = [1, 1, 1]} : vector<8x18x12xbf16> to vector<8x16x12xbf16>
    %15 = vector.extract_strided_slice %13 {offsets = [0, 1, 0], sizes = [8, 16, 12], strides = [1, 1, 1]} : vector<8x18x12xbf16> to vector<8x16x12xbf16>
    %16 = vector.extract_strided_slice %13 {offsets = [0, 2, 0], sizes = [8, 16, 12], strides = [1, 1, 1]} : vector<8x18x12xbf16> to vector<8x16x12xbf16>
    %17 = tpu.concatenate %14, %15, %16 in 2 : vector<8x16x12xbf16>, vector<8x16x12xbf16>, vector<8x16x12xbf16> -> vector<8x16x36xbf16>
    %18 = vector.shape_cast %17 : vector<8x16x36xbf16> to vector<128x36xbf16>
    %c0_8 = arith.constant 0 : index
    %c0_9 = arith.constant 0 : index
    %19 = vector.load %arg3[%c0_8, %c0_9] : memref<36x128xbf16, #tpu.memory_space<vmem>>, vector<36x128xbf16>
    %cst = arith.constant dense<0.000000e+00> : vector<128x128xf32>
    %20 = tpu.matmul %18, %19, %cst {dimension_numbers = #tpu.dot_dimension_numbers<[1], [0], [0], [1], [0, 0, 1, 1], [], []>} : vector<128x36xbf16>, vector<36x128xbf16>, vector<128x128xf32> -> vector<128x128xf32>
    %c0_10 = arith.constant 0 : index
    %c0_11 = arith.constant 0 : index
    %21 = vector.load %arg4[%c0_10, %c0_11] : memref<1x128xf32, #tpu.memory_space<vmem>>, vector<1x128xf32>
    %22 = vector.broadcast %21 : vector<1x128xf32> to vector<128x128xf32>
    %23 = arith.addf %20, %22 : vector<128x128xf32>
    %cst_12 = arith.constant 0.000000e+00 : f32
    %24 = vector.broadcast %cst_12 : f32 to vector<128x128xf32>
    %25 = arith.maximumf %23, %24 : vector<128x128xf32>
    %26 = vector.shape_cast %25 : vector<128x128xf32> to vector<1x8x16x128xf32>
    %c0_13 = arith.constant 0 : index
    %c0_14 = arith.constant 0 : index
    %c0_15 = arith.constant 0 : index
    %c0_16 = arith.constant 0 : index
    %27 = vector.load %arg5[%c0_13, %c0_14, %c0_15, %c0_16] : memref<1x8x16x128xf32, #tpu.memory_space<vmem>>, vector<1x8x16x128xf32>
    tpu.vector_store %arg5[%c0_13, %c0_14, %c0_15, %c0_16], %26 {strides = array<i32>} : memref<1x8x16x128xf32, #tpu.memory_space<vmem>>, vector<1x8x16x128xf32>,
    return
  }
  func.func @transform_0(%arg0: i32, %arg1: i32) -> (i32, i32, i32, i32) {
    %c0_i32 = arith.constant 0 : i32
    %c0_i32_0 = arith.constant 0 : i32
    %c0_i32_1 = arith.constant 0 : i32
    %c0_i32_2 = arith.constant 0 : i32
    return %arg0, %c0_i32, %c0_i32_0, %c0_i32_1 : i32, i32, i32, i32
  }
  func.func @transform_1(%arg0: i32, %arg1: i32) -> (i32, i32) {
    %c0_i32 = arith.constant 0 : i32
    %c0_i32_0 = arith.constant 0 : i32
    %c0_i32_1 = arith.constant 0 : i32
    return %c0_i32, %c0_i32_0 : i32, i32
  }
  func.func @transform_2(%arg0: i32, %arg1: i32) -> (i32, i32) {
    %c0_i32 = arith.constant 0 : i32
    %c0_i32_0 = arith.constant 0 : i32
    %c0_i32_1 = arith.constant 0 : i32
    return %c0_i32, %c0_i32_0 : i32, i32
  }
  func.func @transform_3(%arg0: i32, %arg1: i32) -> (i32, i32, i32, i32) {
    %c0_i32 = arith.constant 0 : i32
    %c0_i32_0 = arith.constant 0 : i32
    %c0_i32_1 = arith.constant 0 : i32
    return %arg0, %arg1, %c0_i32, %c0_i32_0 : i32, i32, i32, i32
  }
}

</mosaic_0001>

<llo_original>
// kernel: tpu_custom_call.1
$region0: #{tpu_custom_call.1}
  #allocation0 [shape = 'u32[]', space=smem, size = 0x4, offset = 0x4, fixed_abs, tag = 'smem constant byte address 0x4 - core index']
  #allocation1 [shape = 'u32[144,128]{1,0:T(1,128)}', space=vmem, size = 0x12000, scoped, tag = 'internal scratch']
  %s0 = inlined_call_operand.vmem [shape: bf16[2,18,18,4], index: 0, kind: input, shape index: {}]
  %s1 = inlined_call_operand.vmem [shape: bf16[36,128], index: 1, kind: input, shape index: {}]
  %s2 = inlined_call_operand.vmem [shape: f32[1,128], index: 2, kind: input, shape index: {}]
  %s3 = inlined_call_operand.hbm [shape: f32[2,16,16,128], index: 3, kind: output, shape index: {}]
  %s4 = sld [smem:[#allocation0]]
  $region45: #{tpu_custom_call.1} parent=0
    _
  %s6 = ssub.s32 1, %s4
  %s7 = scalar_select 0, %s6, %s4
  $region1: #{tpu_custom_call.1} parent=0
    #allocation2 [shape = 'u8[131072]{0}', space=vmem, size = 0x20000, scoped, tag = 'output window, operand 0']
    #allocation3 [shape = 's32[2]{0}', space=sflag, size = 0x8, scoped, tag = 'scoped memory for tpu_custom_call.1']
    %8 = vsyncpa [#allocation3], 0
    %s9 = scalar_lea.sflag [#allocation3], 1
    %10 = vsyncpa %s9, 0
    loop: start=0, step=1, limit=6
    $region2: #{tpu_custom_call.1} parent=1 // loop_pre_header
      _
    $region3: #{tpu_custom_call.1} parent=1 // loop_header
      %s12 = sphi 0, %s16
      %p13 = scmp.ge.s32.totalorder %s12, 6
      %s19 = sphi 0, %s31
      %s20 = sphi 0, %s27
      %s21 = sphi 0, %s19
      %s22 = sphi 0, %s20
      %s23 = sphi 0, %s21
      %s24 = sphi 0, %s22
      %s34 = sphi 0, %s36
      %s37 = sphi 0, %s34
      %s38 = sphi 0, %s37
      %s54 = sphi 0, %s38
      %s58 = sphi 0, %s58
      %s60 = sphi 0, %s58
      %s61 = sphi 0, %s60
      %s75 = sphi 0, %s61
      %s79 = sphi 0, %s79
      %s81 = sphi 0, %s79
      %s82 = sphi 0, %s81
      %s96 = sphi 0, %s82
      %s104 = sphi 0, %s106
      %s107 = sphi 0, %s104
      %s108 = sphi 0, %s107
      %s124 = sphi 0, %s108
    $region4: #{tpu_custom_call.1} parent=1 // loop_header_branch
      %15 = sbr.rel (%p13) target = $region8
    $region5: #{tpu_custom_call.1} parent=1 // loop_body
      %s17 = ssub.s32 %s12, 1
      %s18 = ssub.s32 %s12, 2
      %s25 = sadd.s32 1, %s20
      %p26 = scmp.ge.s32.totalorder %s25, 2
      %s27 = scalar_select %p26, 0, %s25
      %s28 = sadd.s32 1, %s19
      %s29 = scalar_select %p26, %s28, %s19
      %p30 = scmp.ge.s32.totalorder %s29, 2
      %s31 = scalar_select %p30, 0, %s29
      %s32 = ssub.s32 %s19, %s31
      %p33 = scmp.eq.s32.totalorder %s32, 0
      %s35 = sadd.s32 %s34, 1
      %s36 = scalar_select %p33, %s34, %s35
      %p39 = pneg %p33
      %p40 = scmp.eq.s32.totalorder %s12, 3
      %p41 = por %p39, %p40
      %p42 = scmp.ne.s32.totalorder %s34, %s37
      %p43 = scmp.eq.s32.totalorder %s12, 0
      %p44 = por %p42, %p43
      %p45 = scmp.ne.s32.totalorder %s34, %s37
      %p46 = scmp.eq.s32.totalorder %s17, 3
      %p47 = por %p45, %p46
      %p48 = scmp.ne.s32.totalorder %s37, %s38
      %p49 = scmp.eq.s32.totalorder %s17, 0
      %p50 = por %p48, %p49
      %p51 = scmp.ne.s32.totalorder %s37, %s38
      %p52 = scmp.eq.s32.totalorder %s18, 3
      %p53 = por %p51, %p52
      %p55 = scmp.ne.s32.totalorder %s38, %s54
      %p56 = scmp.eq.s32.totalorder %s18, 0
      %p57 = por %p55, %p56
      %s59 = sadd.s32 %s58, 1
      %p62 = scmp.eq.s32.totalorder %s12, 3
      %p63 = scmp.ne.s32.totalorder %s58, %s60
      %p64 = scmp.eq.s32.totalorder %s12, 0
      %p65 = por %p63, %p64
      %p66 = scmp.ne.s32.totalorder %s58, %s60
      %p67 = scmp.eq.s32.totalorder %s17, 3
      %p68 = por %p66, %p67
      %p69 = scmp.ne.s32.totalorder %s60, %s61
      %p70 = scmp.eq.s32.totalorder %s17, 0
      %p71 = por %p69, %p70
      %p72 = scmp.ne.s32.totalorder %s60, %s61
      %p73 = scmp.eq.s32.totalorder %s18, 3
      %p74 = por %p72, %p73
      %p76 = scmp.ne.s32.totalorder %s61, %s75
      %p77 = scmp.eq.s32.totalorder %s18, 0
      %p78 = por %p76, %p77
      %s80 = sadd.s32 %s79, 1
      %p83 = scmp.eq.s32.totalorder %s12, 3
      %p84 = scmp.ne.s32.totalorder %s79, %s81
      %p85 = scmp.eq.s32.totalorder %s12, 0
      %p86 = por %p84, %p85
      %p87 = scmp.ne.s32.totalorder %s79, %s81
      %p88 = scmp.eq.s32.totalorder %s17, 3
      %p89 = por %p87, %p88
      %p90 = scmp.ne.s32.totalorder %s81, %s82
      %p91 = scmp.eq.s32.totalorder %s17, 0
      %p92 = por %p90, %p91
      %p93 = scmp.ne.s32.totalorder %s81, %s82
      %p94 = scmp.eq.s32.totalorder %s18, 3
      %p95 = por %p93, %p94
      %p97 = scmp.ne.s32.totalorder %s82, %s96
      %p98 = scmp.eq.s32.totalorder %s18, 0
      %p99 = por %p97, %p98
      %s100 = ssub.s32 %s19, %s31
      %s101 = ssub.s32 %s20, %s27
      %s102 = sor.u32 %s100, %s101
      %p103 = scmp.eq.s32.totalorder %s102, 0
      %s105 = sadd.s32 %s104, 1
      %s106 = scalar_select %p103, %s104, %s105
      %p109 = pneg %p103
      %p110 = scmp.eq.s32.totalorder %s12, 3
      %p111 = por %p109, %p110
      %p112 = scmp.ne.s32.totalorder %s104, %s107
      %p113 = scmp.eq.s32.totalorder %s12, 0
      %p114 = por %p112, %p113
      %p115 = scmp.ne.s32.totalorder %s104, %s107
      %p116 = scmp.eq.s32.totalorder %s17, 3
      %p117 = por %p115, %p116
      %p118 = scmp.ne.s32.totalorder %s107, %s108
      %p119 = scmp.eq.s32.totalorder %s17, 0
      %p120 = por %p118, %p119
      %p121 = scmp.ne.s32.totalorder %s107, %s108
      %p122 = scmp.eq.s32.totalorder %s18, 3
      %p123 = por %p121, %p122
      %p125 = scmp.ne.s32.totalorder %s108, %s124
      %p126 = scmp.eq.s32.totalorder %s18, 0
      %p127 = por %p125, %p126
      %p128 = scmp.le.s32.totalorder 1, %s12
      %p129 = scmp.lt.s32.totalorder %s12, 5
      %p130 = pnand %p128, %p129
      %p131 = pneg %p130
      // Predicated region
      $region9: #{tpu_custom_call.1} parent=5 // pred_check
        _
      $region10: #{tpu_custom_call.1} parent=5 // pred_check_branch
        %133 = sbr.rel (%p130) target = $region12
      $region11: #{tpu_custom_call.1} parent=5 // pred_region
        %s134 = ssub.s32 %s12, 1
        // Predicated region
        $region13: #{tpu_custom_call.1} parent=11 // pred_check
          %p135 = pneg %p71
        $region14: #{tpu_custom_call.1} parent=11 // pred_check_branch
          %137 = sbr.rel (%p135) target = $region16
        $region15: #{tpu_custom_call.1} parent=11 // pred_region
          _
        $region16: #{tpu_custom_call.1} parent=11 // pred_fallthru
          _
        // Predicated region
        $region17: #{tpu_custom_call.1} parent=11 // pred_check
          %p138 = pneg %p92
        $region18: #{tpu_custom_call.1} parent=11 // pred_check_branch
          %140 = sbr.rel (%p138) target = $region20
        $region19: #{tpu_custom_call.1} parent=11 // pred_region
          _
        $region20: #{tpu_custom_call.1} parent=11 // pred_fallthru
          _
      $region12: #{tpu_custom_call.1} parent=5 // pred_fallthru
        _
      %p141 = scmp.lt.s32.totalorder %s12, 4
      // Predicated region
      $region21: #{tpu_custom_call.1} parent=5 // pred_check
        %p142 = pneg %p141
      $region22: #{tpu_custom_call.1} parent=5 // pred_check_branch
        %144 = sbr.rel (%p142) target = $region24
      $region23: #{tpu_custom_call.1} parent=5 // pred_region
        // Predicated region
        $region25: #{tpu_custom_call.1} parent=23 // pred_check
          %p145 = pneg %p44
        $region26: #{tpu_custom_call.1} parent=23 // pred_check_branch
          %147 = sbr.rel (%p145) target = $region28
        $region27: #{tpu_custom_call.1} parent=23 // pred_region
          %p148 = scmp.lt.s32.totalorder %s19, 1
          %s149 = scalar_select %p148, %s19, 1
          %s150 = smul.addr %s149, 54
          %s151 = smul.addr %s150, 4
          %s152 = scalar_lea.vmem %s0, %s151
        $region28: #{tpu_custom_call.1} parent=23 // pred_fallthru
          _
      $region24: #{tpu_custom_call.1} parent=5 // pred_fallthru
        _
      %p153 = scmp.le.s32.totalorder 1, %s12
      %p154 = scmp.lt.s32.totalorder %s12, 5
      %p155 = pnand %p153, %p154
      %p156 = pneg %p155
      // Predicated region
      $region29: #{tpu_custom_call.1} parent=5 // pred_check
        _
      $region30: #{tpu_custom_call.1} parent=5 // pred_check_branch
        %158 = sbr.rel (%p155) target = $region32
      $region31: #{tpu_custom_call.1} parent=5 // pred_region
        %s159 = ssub.s32 %s12, 1
        %p160 = scmp.lt.s32.totalorder %s21, 1
        %s161 = scalar_select %p160, %s21, 1
        %s162 = smul.addr %s161, 54
        %s163 = smul.addr %s162, 4
        %s164 = scalar_lea.vmem %s0, %s163
        %p165 = pneg %p50
        %p166 = pneg %p47
        %p167 = pneg %p71
        %p168 = pneg %p68
        %p169 = pneg %p92
        %p170 = pneg %p89
        %p171 = pneg %p120
        %p172 = pneg %p117
        %s173 = sand.u32 %s107, 1
        %s174 = scalar_lea.sflag [#allocation3], %s173
        %s175 = sand.u32 %s107, 1
        %s176 = smul.addr %s175, 128
        %s177 = scalar_lea.vmem [#allocation2], %s176
        %p178 = scmp.lt.s32.totalorder %s21, 1
        %s179 = scalar_select %p178, %s21, 1
        %s180 = smul.addr %s179, 54
        %s181 = smul.addr %s180, 4
        %s182 = scalar_lea.vmem %s0, %s181
        %s183 = smul.u32 8, %s22
        %s185 = smul.u32 %s22, 8
        %s186 = smul.u32 %s185, 3
        %s187 = smul.addr %s186, 4
        %s188 = scalar_lea.vmem %s182, %s187
        %v189 = vld [vmem:[%s188] sm:$0xf]
        %v190 = vld [vmem:[%s188 + $0x4] sm:$0xf]
        %v191 = vld [vmem:[%s188 + $0x8] sm:$0x1]
        %v192 = vld [vmem:[%s188 + $0xc] sm:$0xf]
        %v193 = vld [vmem:[%s188 + $0x10] sm:$0xf]
        %v194 = vld [vmem:[%s188 + $0x14] sm:$0x1]
        %v195 = vld [vmem:[%s188 + $0x18] sm:$0xf]
        %v196 = vld [vmem:[%s188 + $0x1c] sm:$0xf]
        %v197 = vld [vmem:[%s188 + $0x20] sm:$0x1]
        %v198 = vld [vmem:[%s188 + $0x24] sm:$0xf]
        %v199 = vld [vmem:[%s188 + $0x28] sm:$0xf]
        %v200 = vld [vmem:[%s188 + $0x2c] sm:$0x1]
        %v201 = vld [vmem:[%s188 + $0x30] sm:$0xf]
        %v202 = vld [vmem:[%s188 + $0x34] sm:$0xf]
        %v203 = vld [vmem:[%s188 + $0x38] sm:$0x1]
        %v204 = vld [vmem:[%s188 + $0x3c] sm:$0xf]
        %v205 = vld [vmem:[%s188 + $0x40] sm:$0xf]
        %v206 = vld [vmem:[%s188 + $0x44] sm:$0x1]
        %v207 = vld [vmem:[%s188 + $0x48] sm:$0xf]
        %v208 = vld [vmem:[%s188 + $0x4c] sm:$0xf]
        %v209 = vld [vmem:[%s188 + $0x50] sm:$0x1]
        %v210 = vld [vmem:[%s188 + $0x54] sm:$0xf]
        %v211 = vld [vmem:[%s188 + $0x58] sm:$0xf]
        %v212 = vld [vmem:[%s188 + $0x5c] sm:$0x1]
        %s213 = sadd.s32 %s185, 1
        %s214 = smul.u32 %s213, 3
        %s215 = smul.addr %s214, 4
        %s216 = scalar_lea.vmem %s182, %s215
        %v217 = vld [vmem:[%s216] sm:$0xf]
        %v218 = vld [vmem:[%s216 + $0x4] sm:$0xf]
        %v219 = vld [vmem:[%s216 + $0x8] sm:$0x1]
        %v220 = vld [vmem:[%s216 + $0xc] sm:$0xf]
        %v221 = vld [vmem:[%s216 + $0x10] sm:$0xf]
        %v222 = vld [vmem:[%s216 + $0x14] sm:$0x1]
        %v223 = vld [vmem:[%s216 + $0x18] sm:$0xf]
        %v224 = vld [vmem:[%s216 + $0x1c] sm:$0xf]
        %v225 = vld [vmem:[%s216 + $0x20] sm:$0x1]
        %v226 = vld [vmem:[%s216 + $0x24] sm:$0xf]
        %v227 = vld [vmem:[%s216 + $0x28] sm:$0xf]
        %v228 = vld [vmem:[%s216 + $0x2c] sm:$0x1]
        %v229 = vld [vmem:[%s216 + $0x30] sm:$0xf]
        %v230 = vld [vmem:[%s216 + $0x34] sm:$0xf]
        %v231 = vld [vmem:[%s216 + $0x38] sm:$0x1]
        %v232 = vld [vmem:[%s216 + $0x3c] sm:$0xf]
        %v233 = vld [vmem:[%s216 + $0x40] sm:$0xf]
        %v234 = vld [vmem:[%s216 + $0x44] sm:$0x1]
        %v235 = vld [vmem:[%s216 + $0x48] sm:$0xf]
        %v236 = vld [vmem:[%s216 + $0x4c] sm:$0xf]
        %v237 = vld [vmem:[%s216 + $0x50] sm:$0x1]
        %v238 = vld [vmem:[%s216 + $0x54] sm:$0xf]
        %v239 = vld [vmem:[%s216 + $0x58] sm:$0xf]
        %v240 = vld [vmem:[%s216 + $0x5c] sm:$0x1]
        %s241 = sadd.s32 %s185, 2
        %s242 = smul.u32 %s241, 3
        %s243 = smul.addr %s242, 4
        %s244 = scalar_lea.vmem %s182, %s243
        %v245 = vld [vmem:[%s244] sm:$0xf]
        %v246 = vld [vmem:[%s244 + $0x4] sm:$0xf]
        %v247 = vld [vmem:[%s244 + $0x8] sm:$0x1]
        %v248 = vld [vmem:[%s244 + $0xc] sm:$0xf]
        %v249 = vld [vmem:[%s244 + $0x10] sm:$0xf]
        %v250 = vld [vmem:[%s244 + $0x14] sm:$0x1]
        %v251 = vld [vmem:[%s244 + $0x18] sm:$0xf]
        %v252 = vld [vmem:[%s244 + $0x1c] sm:$0xf]
        %v253 = vld [vmem:[%s244 + $0x20] sm:$0x1]
        %v254 = vld [vmem:[%s244 + $0x24] sm:$0xf]
        %v255 = vld [vmem:[%s244 + $0x28] sm:$0xf]
        %v256 = vld [vmem:[%s244 + $0x2c] sm:$0x1]
        %v257 = vld [vmem:[%s244 + $0x30] sm:$0xf]
        %v258 = vld [vmem:[%s244 + $0x34] sm:$0xf]
        %v259 = vld [vmem:[%s244 + $0x38] sm:$0x1]
        %v260 = vld [vmem:[%s244 + $0x3c] sm:$0xf]
        %v261 = vld [vmem:[%s244 + $0x40] sm:$0xf]
        %v262 = vld [vmem:[%s244 + $0x44] sm:$0x1]
        %v263 = vld [vmem:[%s244 + $0x48] sm:$0xf]
        %v264 = vld [vmem:[%s244 + $0x4c] sm:$0xf]
        %v265 = vld [vmem:[%s244 + $0x50] sm:$0x1]
        %v266 = vld [vmem:[%s244 + $0x54] sm:$0xf]
        %v267 = vld [vmem:[%s244 + $0x58] sm:$0xf]
        %v268 = vld [vmem:[%s244 + $0x5c] sm:$0x1]
        %v293 = vunpack.c.l.b16 %v189
        %v294 = vunpack.c.l.b16 %v190
        %v295 = vunpack.c.l.b16 %v191
        %v296 = vunpack.c.l.b16 %v192
        %v297 = vunpack.c.l.b16 %v193
        %v298 = vunpack.c.l.b16 %v194
        %v299 = vunpack.c.l.b16 %v195
        %v300 = vunpack.c.l.b16 %v196
        %v301 = vunpack.c.l.b16 %v197
        %v302 = vunpack.c.l.b16 %v198
        %v303 = vunpack.c.l.b16 %v199
        %v304 = vunpack.c.l.b16 %v200
        %v305 = vunpack.c.l.b16 %v201
        %v306 = vunpack.c.l.b16 %v202
        %v307 = vunpack.c.l.b16 %v203
        %v308 = vunpack.c.l.b16 %v204
        %v309 = vunpack.c.l.b16 %v205
        %v310 = vunpack.c.l.b16 %v206
        %v311 = vunpack.c.l.b16 %v207
        %v312 = vunpack.c.l.b16 %v208
        %v313 = vunpack.c.l.b16 %v209
        %v314 = vunpack.c.l.b16 %v210
        %v315 = vunpack.c.l.b16 %v211
        %v316 = vunpack.c.l.b16 %v212
        %v317 = vpack.c.b16 %v294, %v293
        %v318 = vpack.c.b16 %v295, %v295
        %v319 = vpack.c.b16 %v297, %v296
        %v320 = vpack.c.b16 %v298, %v298
        %v321 = vpack.c.b16 %v300, %v299
        %v322 = vpack.c.b16 %v301, %v301
        %v323 = vpack.c.b16 %v303, %v302
        %v324 = vpack.c.b16 %v304, %v304
        %v325 = vpack.c.b16 %v306, %v305
        %v326 = vpack.c.b16 %v307, %v307
        %v327 = vpack.c.b16 %v309, %v308
        %v328 = vpack.c.b16 %v310, %v310
        %v329 = vpack.c.b16 %v312, %v311
        %v330 = vpack.c.b16 %v313, %v313
        %v331 = vpack.c.b16 %v315, %v314
        %v332 = vpack.c.b16 %v316, %v316
        %v357 = vunpack.c.l.b16 %v217
        %v358 = vunpack.c.l.b16 %v218
        %v359 = vunpack.c.l.b16 %v219
        %v360 = vunpack.c.l.b16 %v220
        %v361 = vunpack.c.l.b16 %v221
        %v362 = vunpack.c.l.b16 %v222
        %v363 = vunpack.c.l.b16 %v223
        %v364 = vunpack.c.l.b16 %v224
        %v365 = vunpack.c.l.b16 %v225
        %v366 = vunpack.c.l.b16 %v226
        %v367 = vunpack.c.l.b16 %v227
        %v368 = vunpack.c.l.b16 %v228
        %v369 = vunpack.c.l.b16 %v229
        %v370 = vunpack.c.l.b16 %v230
        %v371 = vunpack.c.l.b16 %v231
        %v372 = vunpack.c.l.b16 %v232
        %v373 = vunpack.c.l.b16 %v233
        %v374 = vunpack.c.l.b16 %v234
        %v375 = vunpack.c.l.b16 %v235
        %v376 = vunpack.c.l.b16 %v236
        %v377 = vunpack.c.l.b16 %v237
        %v378 = vunpack.c.l.b16 %v238
        %v379 = vunpack.c.l.b16 %v239
        %v380 = vunpack.c.l.b16 %v240
        %v381 = vpack.c.b16 %v358, %v357
        %v382 = vpack.c.b16 %v359, %v359
        %v383 = vpack.c.b16 %v361, %v360
        %v384 = vpack.c.b16 %v362, %v362
        %v385 = vpack.c.b16 %v364, %v363
        %v386 = vpack.c.b16 %v365, %v365
        %v387 = vpack.c.b16 %v367, %v366
        %v388 = vpack.c.b16 %v368, %v368
        %v389 = vpack.c.b16 %v370, %v369
        %v390 = vpack.c.b16 %v371, %v371
        %v391 = vpack.c.b16 %v373, %v372
        %v392 = vpack.c.b16 %v374, %v374
        %v393 = vpack.c.b16 %v376, %v375
        %v394 = vpack.c.b16 %v377, %v377
        %v395 = vpack.c.b16 %v379, %v378
        %v396 = vpack.c.b16 %v380, %v380
        %397 = vrot.lane.b32.xlu0 %v381, 4
        %v398 = vpop.permute.xlu0 %397
        %399 = vrot.lane.b32.xlu0 %v382, 4
        %v400 = vpop.permute.xlu0 %399
        %401 = vrot.lane.b32.xlu0 %v383, 4
        %v402 = vpop.permute.xlu0 %401
        %403 = vrot.lane.b32.xlu0 %v384, 4
        %v404 = vpop.permute.xlu0 %403
        %405 = vrot.lane.b32.xlu0 %v385, 4
        %v406 = vpop.permute.xlu0 %405
        %407 = vrot.lane.b32.xlu0 %v386, 4
        %v408 = vpop.permute.xlu0 %407
        %409 = vrot.lane.b32.xlu0 %v387, 4
        %v410 = vpop.permute.xlu0 %409
        %411 = vrot.lane.b32.xlu0 %v388, 4
        %v412 = vpop.permute.xlu0 %411
        %413 = vrot.lane.b32.xlu0 %v389, 4
        %v414 = vpop.permute.xlu0 %413
        %415 = vrot.lane.b32.xlu0 %v390, 4
        %v416 = vpop.permute.xlu0 %415
        %417 = vrot.lane.b32.xlu0 %v391, 4
        %v418 = vpop.permute.xlu0 %417
        %419 = vrot.lane.b32.xlu0 %v392, 4
        %v420 = vpop.permute.xlu0 %419
        %421 = vrot.lane.b32.xlu0 %v393, 4
        %v422 = vpop.permute.xlu0 %421
        %423 = vrot.lane.b32.xlu0 %v394, 4
        %v424 = vpop.permute.xlu0 %423
        %425 = vrot.lane.b32.xlu0 %v395, 4
        %v426 = vpop.permute.xlu0 %425
        %427 = vrot.lane.b32.xlu0 %v396, 4
        %v428 = vpop.permute.xlu0 %427
        %v453 = vunpack.c.l.b16 %v245
        %v454 = vunpack.c.l.b16 %v246
        %v455 = vunpack.c.l.b16 %v247
        %v456 = vunpack.c.l.b16 %v248
        %v457 = vunpack.c.l.b16 %v249
        %v458 = vunpack.c.l.b16 %v250
        %v459 = vunpack.c.l.b16 %v251
        %v460 = vunpack.c.l.b16 %v252
        %v461 = vunpack.c.l.b16 %v253
        %v462 = vunpack.c.l.b16 %v254
        %v463 = vunpack.c.l.b16 %v255
        %v464 = vunpack.c.l.b16 %v256
        %v465 = vunpack.c.l.b16 %v257
        %v466 = vunpack.c.l.b16 %v258
        %v467 = vunpack.c.l.b16 %v259
        %v468 = vunpack.c.l.b16 %v260
        %v469 = vunpack.c.l.b16 %v261
        %v470 = vunpack.c.l.b16 %v262
        %v471 = vunpack.c.l.b16 %v263
        %v472 = vunpack.c.l.b16 %v264
        %v473 = vunpack.c.l.b16 %v265
        %v474 = vunpack.c.l.b16 %v266
        %v475 = vunpack.c.l.b16 %v267
        %v476 = vunpack.c.l.b16 %v268
        %v477 = vpack.c.b16 %v454, %v453
        %v478 = vpack.c.b16 %v455, %v455
        %v479 = vpack.c.b16 %v457, %v456
        %v480 = vpack.c.b16 %v458, %v458
        %v481 = vpack.c.b16 %v460, %v459
        %v482 = vpack.c.b16 %v461, %v461
        %v483 = vpack.c.b16 %v463, %v462
        %v484 = vpack.c.b16 %v464, %v464
        %v485 = vpack.c.b16 %v466, %v465
        %v486 = vpack.c.b16 %v467, %v467
        %v487 = vpack.c.b16 %v469, %v468
        %v488 = vpack.c.b16 %v470, %v470
        %v489 = vpack.c.b16 %v472, %v471
        %v490 = vpack.c.b16 %v473, %v473
        %v491 = vpack.c.b16 %v475, %v474
        %v492 = vpack.c.b16 %v476, %v476
        %493 = vrot.lane.b32.xlu0 %v477, 8
        %v494 = vpop.permute.xlu0 %493
        %495 = vrot.lane.b32.xlu0 %v478, 8
        %v496 = vpop.permute.xlu0 %495
        %497 = vrot.lane.b32.xlu0 %v479, 8
        %v498 = vpop.permute.xlu0 %497
        %499 = vrot.lane.b32.xlu0 %v480, 8
        %v500 = vpop.permute.xlu0 %499
        %501 = vrot.lane.b32.xlu0 %v481, 8
        %v502 = vpop.permute.xlu0 %501
        %503 = vrot.lane.b32.xlu0 %v482, 8
        %v504 = vpop.permute.xlu0 %503
        %505 = vrot.lane.b32.xlu0 %v483, 8
        %v506 = vpop.permute.xlu0 %505
        %507 = vrot.lane.b32.xlu0 %v484, 8
        %v508 = vpop.permute.xlu0 %507
        %509 = vrot.lane.b32.xlu0 %v485, 8
        %v510 = vpop.permute.xlu0 %509
        %511 = vrot.lane.b32.xlu0 %v486, 8
        %v512 = vpop.permute.xlu0 %511
        %513 = vrot.lane.b32.xlu0 %v487, 8
        %v514 = vpop.permute.xlu0 %513
        %515 = vrot.lane.b32.xlu0 %v488, 8
        %v516 = vpop.permute.xlu0 %515
        %517 = vrot.lane.b32.xlu0 %v489, 8
        %v518 = vpop.permute.xlu0 %517
        %519 = vrot.lane.b32.xlu0 %v490, 8
        %v520 = vpop.permute.xlu0 %519
        %521 = vrot.lane.b32.xlu0 %v491, 8
        %v522 = vpop.permute.xlu0 %521
        %523 = vrot.lane.b32.xlu0 %v492, 8
        %v524 = vpop.permute.xlu0 %523
        %vm525 = vcmask 31744
        %v528 = vsel %vm525, %v317, %v398
        %v531 = vsel %vm525, %v318, %v400
        %v534 = vsel %vm525, %v319, %v402
        %v537 = vsel %vm525, %v320, %v404
        %v540 = vsel %vm525, %v321, %v406
        %v543 = vsel %vm525, %v322, %v408
        %v546 = vsel %vm525, %v323, %v410
        %v549 = vsel %vm525, %v324, %v412
        %v552 = vsel %vm525, %v325, %v414
        %v555 = vsel %vm525, %v326, %v416
        %v558 = vsel %vm525, %v327, %v418
        %v561 = vsel %vm525, %v328, %v420
        %v564 = vsel %vm525, %v329, %v422
        %v567 = vsel %vm525, %v330, %v424
        %v570 = vsel %vm525, %v331, %v426
        %v573 = vsel %vm525, %v332, %v428
        %vm574 = vcmask 64512
        %v576 = vsel %vm574, %v528, %v494
        %v578 = vsel %vm574, %v531, %v496
        %v580 = vsel %vm574, %v534, %v498
        %v582 = vsel %vm574, %v537, %v500
        %v584 = vsel %vm574, %v540, %v502
        %v586 = vsel %vm574, %v543, %v504
        %v588 = vsel %vm574, %v546, %v506
        %v590 = vsel %vm574, %v549, %v508
        %v592 = vsel %vm574, %v552, %v510
        %v594 = vsel %vm574, %v555, %v512
        %v596 = vsel %vm574, %v558, %v514
        %v598 = vsel %vm574, %v561, %v516
        %v600 = vsel %vm574, %v564, %v518
        %v602 = vsel %vm574, %v567, %v520
        %v604 = vsel %vm574, %v570, %v522
        %v606 = vsel %vm574, %v573, %v524
        %vm607 = vsmask.f32 7424
        %v608 = vshrl.u32 %v576, 16
        %v610 = vshll.u32 %v576, 16
        %v612 = vrot.slane %v610, 1
        %v613 = vor.u32 %v608, %v612
        %v614 = vshll.u32 %v578, 16
        %v616 = vrot.slane %v614, 1
        %v617 = vsel %vm607, %v613, %v616
        %v618 = vshrl.u32 %v580, 16
        %v620 = vshll.u32 %v580, 16
        %v622 = vrot.slane %v620, 1
        %v623 = vor.u32 %v618, %v622
        %v624 = vshll.u32 %v582, 16
        %v626 = vrot.slane %v624, 1
        %v627 = vsel %vm607, %v623, %v626
        %v628 = vshrl.u32 %v584, 16
        %v630 = vshll.u32 %v584, 16
        %v632 = vrot.slane %v630, 1
        %v633 = vor.u32 %v628, %v632
        %v634 = vshll.u32 %v586, 16
        %v636 = vrot.slane %v634, 1
        %v637 = vsel %vm607, %v633, %v636
        %v638 = vshrl.u32 %v588, 16
        %v640 = vshll.u32 %v588, 16
        %v642 = vrot.slane %v640, 1
        %v643 = vor.u32 %v638, %v642
        %v644 = vshll.u32 %v590, 16
        %v646 = vrot.slane %v644, 1
        %v647 = vsel %vm607, %v643, %v646
        %v648 = vshrl.u32 %v592, 16
        %v650 = vshll.u32 %v592, 16
        %v652 = vrot.slane %v650, 1
        %v653 = vor.u32 %v648, %v652
        %v654 = vshll.u32 %v594, 16
        %v656 = vrot.slane %v654, 1
        %v657 = vsel %vm607, %v653, %v656
        %v658 = vshrl.u32 %v596, 16
        %v660 = vshll.u32 %v596, 16
        %v662 = vrot.slane %v660, 1
        %v663 = vor.u32 %v658, %v662
        %v664 = vshll.u32 %v598, 16
        %v666 = vrot.slane %v664, 1
        %v667 = vsel %vm607, %v663, %v666
        %v668 = vshrl.u32 %v600, 16
        %v670 = vshll.u32 %v600, 16
        %v672 = vrot.slane %v670, 1
        %v673 = vor.u32 %v668, %v672
        %v674 = vshll.u32 %v602, 16
        %v676 = vrot.slane %v674, 1
        %v677 = vsel %vm607, %v673, %v676
        %v678 = vshrl.u32 %v604, 16
        %v680 = vshll.u32 %v604, 16
        %v682 = vrot.slane %v680, 1
        %v683 = vor.u32 %v678, %v682
        %v684 = vshll.u32 %v606, 16
        %v686 = vrot.slane %v684, 1
        %v687 = vsel %vm607, %v683, %v686
        %688 = vrot.lane.b32.xlu0 %v617, 12
        %v689 = vpop.permute.xlu0 %688
        %690 = vrot.lane.b32.xlu0 %v627, 12
        %v691 = vpop.permute.xlu0 %690
        %692 = vrot.lane.b32.xlu0 %v637, 12
        %v693 = vpop.permute.xlu0 %692
        %694 = vrot.lane.b32.xlu0 %v647, 12
        %v695 = vpop.permute.xlu0 %694
        %696 = vrot.lane.b32.xlu0 %v657, 12
        %v697 = vpop.permute.xlu0 %696
        %698 = vrot.lane.b32.xlu0 %v667, 12
        %v699 = vpop.permute.xlu0 %698
        %700 = vrot.lane.b32.xlu0 %v677, 12
        %v701 = vpop.permute.xlu0 %700
        %702 = vrot.lane.b32.xlu0 %v687, 12
        %v703 = vpop.permute.xlu0 %702
        %vm720 = vcmask 1046528
        %v721 = vrot.slane %v576, 1
        %v722 = vrot.slane %v578, 1
        %v723 = vsel %vm720, %v721, %v722
        %v724 = vrot.slane %v580, 1
        %v725 = vrot.slane %v582, 1
        %v726 = vsel %vm720, %v724, %v725
        %v727 = vrot.slane %v584, 1
        %v728 = vrot.slane %v586, 1
        %v729 = vsel %vm720, %v727, %v728
        %v730 = vrot.slane %v588, 1
        %v731 = vrot.slane %v590, 1
        %v732 = vsel %vm720, %v730, %v731
        %v733 = vrot.slane %v592, 1
        %v734 = vrot.slane %v594, 1
        %v735 = vsel %vm720, %v733, %v734
        %v736 = vrot.slane %v596, 1
        %v737 = vrot.slane %v598, 1
        %v738 = vsel %vm720, %v736, %v737
        %v739 = vrot.slane %v600, 1
        %v740 = vrot.slane %v602, 1
        %v741 = vsel %vm720, %v739, %v740
        %v742 = vrot.slane %v604, 1
        %v743 = vrot.slane %v606, 1
        %v744 = vsel %vm720, %v742, %v743
        %745 = vrot.lane.b32.xlu0 %v723, 24
        %v746 = vpop.permute.xlu0 %745
        %747 = vrot.lane.b32.xlu0 %v726, 24
        %v748 = vpop.permute.xlu0 %747
        %749 = vrot.lane.b32.xlu0 %v729, 24
        %v750 = vpop.permute.xlu0 %749
        %751 = vrot.lane.b32.xlu0 %v732, 24
        %v752 = vpop.permute.xlu0 %751
        %753 = vrot.lane.b32.xlu0 %v735, 24
        %v754 = vpop.permute.xlu0 %753
        %755 = vrot.lane.b32.xlu0 %v738, 24
        %v756 = vpop.permute.xlu0 %755
        %757 = vrot.lane.b32.xlu0 %v741, 24
        %v758 = vpop.permute.xlu0 %757
        %759 = vrot.lane.b32.xlu0 %v744, 24
        %v760 = vpop.permute.xlu0 %759
        %vm761 = vcmask 97280
        %v763 = vsel %vm761, %v576, %v689
        %v765 = vsel %vm761, %v580, %v691
        %v767 = vsel %vm761, %v584, %v693
        %v769 = vsel %vm761, %v588, %v695
        %v771 = vsel %vm761, %v592, %v697
        %v773 = vsel %vm761, %v596, %v699
        %v775 = vsel %vm761, %v600, %v701
        %v777 = vsel %vm761, %v604, %v703
        %vm778 = vcmask 195584
        %v780 = vsel %vm778, %v763, %v746
        %v782 = vsel %vm778, %v765, %v748
        %v784 = vsel %vm778, %v767, %v750
        %v786 = vsel %vm778, %v769, %v752
        %v788 = vsel %vm778, %v771, %v754
        %v790 = vsel %vm778, %v773, %v756
        %v792 = vsel %vm778, %v775, %v758
        %v794 = vsel %vm778, %v777, %v760
        %v795 = vld [vmem:[%s1] sm:$0xf]
        %v796 = vld [vmem:[%s1 + $0x4] sm:$0xf]
        %v797 = vld [vmem:[%s1 + $0x8] sm:$0xf]
        %v798 = vld [vmem:[%s1 + $0xc] sm:$0xf]
        %v799 = vld [vmem:[%s1 + $0x10] sm:$0x3]
        %v800 = vld [vmem:[%s2] sm:$0x1]
        %v802 = vlaneseq
        %v803 = vshrl.u32 %v802, 7
        %v804 = vsub.s32 0, %v803
        %v805 = vrot.slane %v800, %v804
        %v812 = vunpack.c.l.b16 %v795
        %v813 = vunpack.c.l.b16 %v796
        %v814 = vunpack.c.l.b16 %v797
        %v815 = vunpack.c.l.b16 %v798
        %v816 = vunpack.c.l.b16 %v799
        %v817 = vpack.c.b16 %v813, %v812
        %v818 = vpack.c.b16 %v815, %v814
        %v819 = vpack.c.b16 %v816, %v816
        %vm822 = vcmask 293888
        %v823 = vsel %vm822, %v780, 0
        %v825 = vsel %vm822, %v782, 0
        %v827 = vsel %vm822, %v784, 0
        %v829 = vsel %vm822, %v786, 0
        %v831 = vsel %vm822, %v788, 0
        %v833 = vsel %vm822, %v790, 0
        %v835 = vsel %vm822, %v792, 0
        %v837 = vsel %vm822, %v794, 0
        %vm839 = vcmask 1041408
        %v841 = vsel %vm839, %v819, 0
        %843 = vmatprep.subr.bf16.mxu0 0
        %844 = vmatpush1.bf16.msra.mxu0 0
        %845 = vmatprep.subr.bf16.mxu0 0
        %846 = vmatpush1.bf16.msra.mxu0 0
        %847 = vmatprep.subr.bf16.mxu0 0
        %848 = vmatpush1.bf16.msra.mxu0 0
        %849 = vmatprep.subr.bf16.mxu0 0
        %850 = vmatpush1.bf16.msra.mxu0 0
        %851 = vmatprep.subr.bf16.mxu0 0
        %852 = vmatpush1.bf16.msra.mxu0 0
        %853 = vmatprep.subr.bf16.mxu0 0
        %854 = vmatpush1.bf16.msra.mxu0 %v841
        %855 = vmatprep.subr.bf16.mxu0 0
        %856 = vmatpush1.bf16.msra.mxu0 %v818
        %857 = vmatprep.subr.bf16.mxu0 0
        %858 = vmatpush1.bf16.msra.mxu0 %v817
        %859 = vmatprep.subr.bf16.mxu0 0
        %860 = vmatpush2.bf16.msra.mxu0 0
        %861 = vmatprep.subr.bf16.mxu0 0
        %862 = vmatpush2.bf16.msra.mxu0 0
        %863 = vmatprep.subr.bf16.mxu0 0
        %864 = vmatpush2.bf16.msra.mxu0 0
        %865 = vmatprep.subr.bf16.mxu0 0
        %866 = vmatpush2.bf16.msra.mxu0 0
        %867 = vmatprep.subr.bf16.mxu0 0
        %868 = vmatpush2.bf16.msra.mxu0 0
        %869 = vmatprep.subr.bf16.mxu0 0
        %870 = vmatpush2.bf16.msra.mxu0 0
        %871 = vmatprep.subr.bf16.mxu0 0
        %872 = vmatpush2.bf16.msra.mxu0 0
        %873 = vmatprep.subr.bf16.mxu0 0
        %874 = vmatpush2.bf16.msra.mxu0 0
        %875 = vmatprep.mubr.bf16.mxu0 0
        %876 = vmatmul.mubr.bf16.gmra.mxu0 %v823
        %v877 = vpop.f32.mrf.mxu0
        %v878 = vadd.f32 %v805, %v877
        %v879 = vpop.f32.mrf.mxu0
        %v880 = vpop.f32.mrf.mxu0
        %v881 = vadd.f32 %v805, %v880
        %v882 = vpop.f32.mrf.mxu0
        %883 = vmatprep.mubr.bf16.mxu0 0
        %884 = vmatmul.mubr.bf16.gmra.mxu0 %v825
        %v885 = vpop.f32.mrf.mxu0
        %v886 = vadd.f32 %v805, %v885
        %v887 = vpop.f32.mrf.mxu0
        %v888 = vpop.f32.mrf.mxu0
        %v889 = vadd.f32 %v805, %v888
        %v890 = vpop.f32.mrf.mxu0
        %891 = vmatprep.mubr.bf16.mxu0 0
        %892 = vmatmul.mubr.bf16.gmra.mxu0 %v827
        %v893 = vpop.f32.mrf.mxu0
        %v894 = vadd.f32 %v805, %v893
        %v895 = vpop.f32.mrf.mxu0
        %v896 = vpop.f32.mrf.mxu0
        %v897 = vadd.f32 %v805, %v896
        %v898 = vpop.f32.mrf.mxu0
        %899 = vmatprep.mubr.bf16.mxu0 0
        %900 = vmatmul.mubr.bf16.gmra.mxu0 %v829
        %v901 = vpop.f32.mrf.mxu0
        %v902 = vadd.f32 %v805, %v901
        %v903 = vpop.f32.mrf.mxu0
        %v904 = vpop.f32.mrf.mxu0
        %v905 = vadd.f32 %v805, %v904
        %v906 = vpop.f32.mrf.mxu0
        %907 = vmatprep.mubr.bf16.mxu0 0
        %908 = vmatmul.mubr.bf16.gmra.mxu0 %v831
        %v909 = vpop.f32.mrf.mxu0
        %v910 = vadd.f32 %v805, %v909
        %v911 = vpop.f32.mrf.mxu0
        %v912 = vpop.f32.mrf.mxu0
        %v913 = vadd.f32 %v805, %v912
        %v914 = vpop.f32.mrf.mxu0
        %915 = vmatprep.mubr.bf16.mxu0 0
        %916 = vmatmul.mubr.bf16.gmra.mxu0 %v833
        %v917 = vpop.f32.mrf.mxu0
        %v918 = vadd.f32 %v805, %v917
        %v919 = vpop.f32.mrf.mxu0
        %v920 = vpop.f32.mrf.mxu0
        %v921 = vadd.f32 %v805, %v920
        %v922 = vpop.f32.mrf.mxu0
        %923 = vmatprep.mubr.bf16.mxu0 0
        %924 = vmatmul.mubr.bf16.gmra.mxu0 %v835
        %v925 = vpop.f32.mrf.mxu0
        %v926 = vadd.f32 %v805, %v925
        %v927 = vpop.f32.mrf.mxu0
        %v928 = vpop.f32.mrf.mxu0
        %v929 = vadd.f32 %v805, %v928
        %v930 = vpop.f32.mrf.mxu0
        %931 = vmatprep.mubr.bf16.mxu0 0
        %932 = vmatmul.mubr.bf16.gmra.mxu0 %v837
        %v933 = vpop.f32.mrf.mxu0
        %v934 = vadd.f32 %v805, %v933
        %v935 = vpop.f32.mrf.mxu0
        %v936 = vpop.f32.mrf.mxu0
        %v937 = vadd.f32 %v805, %v936
        %v938 = vpop.f32.mrf.mxu0
        %939 = vdwg.mxu0
        %v940 = vmax.f32 %v878, 0.0
        %v941 = vmax.f32 %v881, 0.0
        %v942 = vmax.f32 %v886, 0.0
        %v943 = vmax.f32 %v889, 0.0
        %v944 = vmax.f32 %v894, 0.0
        %v945 = vmax.f32 %v897, 0.0
        %v946 = vmax.f32 %v902, 0.0
        %v947 = vmax.f32 %v905, 0.0
        %v948 = vmax.f32 %v910, 0.0
        %v949 = vmax.f32 %v913, 0.0
        %v950 = vmax.f32 %v918, 0.0
        %v951 = vmax.f32 %v921, 0.0
        %v952 = vmax.f32 %v926, 0.0
        %v953 = vmax.f32 %v929, 0.0
        %v954 = vmax.f32 %v934, 0.0
        %v955 = vmax.f32 %v937, 0.0
        %956 = vst [vmem:[%s177] sm:$0xff] %v940
        %957 = vst [vmem:[%s177 + $0x8] sm:$0xff] %v941
        %958 = vst [vmem:[%s177 + $0x10] sm:$0xff] %v942
        %959 = vst [vmem:[%s177 + $0x18] sm:$0xff] %v943
        %960 = vst [vmem:[%s177 + $0x20] sm:$0xff] %v944
        %961 = vst [vmem:[%s177 + $0x28] sm:$0xff] %v945
        %962 = vst [vmem:[%s177 + $0x30] sm:$0xff] %v946
        %963 = vst [vmem:[%s177 + $0x38] sm:$0xff] %v947
        %964 = vst [vmem:[%s177 + $0x40] sm:$0xff] %v948
        %965 = vst [vmem:[%s177 + $0x48] sm:$0xff] %v949
        %966 = vst [vmem:[%s177 + $0x50] sm:$0xff] %v950
        %967 = vst [vmem:[%s177 + $0x58] sm:$0xff] %v951
        %968 = vst [vmem:[%s177 + $0x60] sm:$0xff] %v952
        %969 = vst [vmem:[%s177 + $0x68] sm:$0xff] %v953
        %970 = vst [vmem:[%s177 + $0x70] sm:$0xff] %v954
        %971 = vst [vmem:[%s177 + $0x78] sm:$0xff] %v955
        %s972 = sand.u32 %s107, 1
        %s973 = scalar_lea.sflag [#allocation3], %s972
        %s974 = sand.u32 %s107, 1
        %s975 = smul.addr %s974, 128
        %s976 = scalar_lea.vmem [#allocation2], %s975
        // Predicated region
        $region33: #{tpu_custom_call.1} parent=31 // pred_check
          %p977 = pneg %p117
        $region34: #{tpu_custom_call.1} parent=31 // pred_check_branch
          %979 = sbr.rel (%p977) target = $region36
        $region35: #{tpu_custom_call.1} parent=31 // pred_region
          %s980 = smul.u32 8, %s22
          %s982 = ssub.s32 2048, 2048
          %983 = vsyncadd %s973, %s982
          %s984 = smul.addr %s980, 2
          %s985 = smul.addr %s21, 32
          %s986 = sadd.s32 %s984, %s985
          %s987 = smul.addr %s986, 128
          %s988 = scalar_lea.hbm %s3, %s987
          %s989 = sshll.u32 %s976, 4
          %s990 = int_to_ptr.vmem [resolvable:$true] %s989
          %995 = dma.vmem_to_hbm [thread:$0]  %s990, 2048, %s988, %s973, 128, 128, 8
        $region36: #{tpu_custom_call.1} parent=31 // pred_fallthru
          _
      $region32: #{tpu_custom_call.1} parent=5 // pred_fallthru
        _
      %p996 = scmp.le.s32.totalorder 2, %s12
      // Predicated region
      $region37: #{tpu_custom_call.1} parent=5 // pred_check
        %p997 = pneg %p996
      $region38: #{tpu_custom_call.1} parent=5 // pred_check_branch
        %999 = sbr.rel (%p997) target = $region40
      $region39: #{tpu_custom_call.1} parent=5 // pred_region
        %s1000 = ssub.s32 %s12, 2
        // Predicated region
        $region41: #{tpu_custom_call.1} parent=39 // pred_check
          %p1001 = pneg %p123
        $region42: #{tpu_custom_call.1} parent=39 // pred_check_branch
          %1003 = sbr.rel (%p1001) target = $region44
        $region43: #{tpu_custom_call.1} parent=39 // pred_region
          %s1004 = sand.u32 %s108, 1
          %s1005 = scalar_lea.sflag [#allocation3], %s1004
          %s1006 = sand.u32 %s108, 1
          %s1007 = smul.addr %s1006, 128
          %s1008 = scalar_lea.vmem [#allocation2], %s1007
          %1009 = dma.done %s1005, 2048
        $region44: #{tpu_custom_call.1} parent=39 // pred_fallthru
          _
      $region40: #{tpu_custom_call.1} parent=5 // pred_fallthru
        _
    $region6: #{tpu_custom_call.1} parent=1 // loop_footer
      %s16 = sadd.s32 1, %s12
    $region7: #{tpu_custom_call.1} parent=1 // loop_footer_branch
      %11 = sbr.rel target = $region3
    $region8: #{tpu_custom_call.1} parent=1 // loop_exit
      _
    %1010 = vsyncpa [#allocation3], 1
    %s1011 = scalar_lea.sflag [#allocation3], 1
    %1012 = vsyncpa %s1011, 1

</llo_original>
